<compile_context>
chip_gen: v6e
topology: v6e:2x2x1
jax: 0.10.0
libtpu: 0.0.40
codegen_flags: <defaults>
</compile_context>

<pallas_src>
import jax
import jax.numpy as jnp
from jax.experimental import pallas as pl
from jax.experimental.pallas import tpu as pltpu

HIDDEN_PAD = 128   # lane-native width for the padded hidden / output dims
NUM_CLASSES = 2


def _round_up(n, m):
    return ((n + m - 1) // m) * m


def _cdiv(a, b):
    return -(-a // b)


def _pad_to(a, shape):
    pads = [(0, s - d) for d, s in zip(a.shape, shape)]
    return jnp.pad(a, pads)


def _choose_batch_tile(B, block_batch=1024, min_grid=2):
    """Pick (TB, B_pad): multiple of 8, bounded padding, >=2 grid steps when possible."""
    B8 = _round_up(B, 8)
    steps = _cdiv(B8, block_batch)
    if steps < min_grid and B8 >= min_grid * 8:
        steps = min_grid                     # keep both v7x TensorCores busy
    TB = _round_up(_cdiv(B8, steps), 8)
    B_pad = _round_up(B8, TB)
    return TB, B_pad


def mlp_kernel(x_ref, w1_ref, w23_ref, b_ref, o_ref):
    # x_ref:  [TB, D_in]        bf16
    # w1_ref: [D_in, 128]       bf16   (layer1 weights, out-dim zero-padded 50->128)
    # w23_ref:[2, 128, 128]     bf16   (layers 2 & 3, zero-padded)
    # b_ref:  [3, 128]          f32    (biases, zero-padded)
    # o_ref:  [TB, 2]           f32
    x = x_ref[...]
    b = b_ref[...]

    # Layer 1: Linear + ReLU. Padded output lanes stay exactly 0 (zero W cols / bias,
    # ReLU(0)=0), so the padding is mathematically exact through layers 2 and 3.
    h1 = jnp.dot(x, w1_ref[...], preferred_element_type=jnp.float32)
    h1 = jnp.maximum(h1 + b[0:1, :], 0.0)

    # Layer 2: Linear + ReLU (bf16 operands, f32 accumulate).
    h2 = jnp.dot(h1.astype(jnp.bfloat16), w23_ref[0],
                 preferred_element_type=jnp.float32)
    h2 = jnp.maximum(h2 + b[1:2, :], 0.0)

    # Layer 3: Linear; only the first NUM_CLASSES output lanes are real.
    logits = jnp.dot(h2.astype(jnp.bfloat16), w23_ref[1],
                     preferred_element_type=jnp.float32) + b[2:3, :]

    # Exact 2-class softmax via per-lane arithmetic (no cross-lane reduce, exact divide).
    l0 = logits[:, 0:1]
    l1 = logits[:, 1:2]
    m = jnp.maximum(l0, l1)
    e0 = jnp.exp(l0 - m)
    e1 = jnp.exp(l1 - m)
    inv = 1.0 / (e0 + e1)                     # exact: rows sum to 1
    lane = jax.lax.broadcasted_iota(jnp.int32, (logits.shape[0], NUM_CLASSES), 1)
    o_ref[...] = jnp.where(lane == 0, e0 * inv, e1 * inv).astype(o_ref.dtype)


def pack_params(params):
    """One-time packing (call at init, not per forward): pad to 128 lanes, cast weights
    to bf16, stack layers 2/3 into a single slab and all biases into one [3,128] slab."""
    H = HIDDEN_PAD
    d_in = params["w1"].shape[0]
    w1 = _pad_to(params["w1"], (d_in, H)).astype(jnp.bfloat16)          # [D_in, 128]
    w23 = jnp.stack([
        _pad_to(params["w2"], (H, H)),
        _pad_to(params["w3"], (H, H)),
    ]).astype(jnp.bfloat16)                                             # [2, 128, 128]
    b = jnp.stack([
        _pad_to(params["b1"].reshape(-1), (H,)),
        _pad_to(params["b2"].reshape(-1), (H,)),
        _pad_to(params["b3"].reshape(-1), (H,)),
    ]).astype(jnp.float32)                                              # [3, 128]
    return {"w1": w1, "w23": w23, "b": b}


def sonar_mlp(x, packed, *, block_batch=1024):
    """x: [B, input_dim] float (cast to bf16 for the DMA). packed: from pack_params."""
    w1, w23, b = packed["w1"], packed["w23"], packed["b"]
    B, D = x.shape
    TB, B_pad = _choose_batch_tile(B, block_batch)

    x_b = x.astype(jnp.bfloat16)              # ideally callers pass bf16 already
    if B_pad != B:
        x_b = jnp.pad(x_b, ((0, B_pad - B), (0, 0)))   # batch-only padding, bounded

    grid = (B_pad // TB,)
    flops = 2 * B_pad * (D * HIDDEN_PAD + 2 * HIDDEN_PAD * HIDDEN_PAD)
    bytes_accessed = (x_b.size * 2 + w1.size * 2 + w23.size * 2 + b.size * 4
                      + B_pad * NUM_CLASSES * 4)

    out = pl.pallas_call(
        mlp_kernel,
        out_shape=jax.ShapeDtypeStruct((B_pad, NUM_CLASSES), jnp.float32),
        grid=grid,
        in_specs=[
            pl.BlockSpec((TB, D), lambda i: (i, 0)),                 # x: tiled over batch
            pl.BlockSpec((D, HIDDEN_PAD), lambda i: (0, 0)),         # w1: VMEM-resident
            pl.BlockSpec((2, HIDDEN_PAD, HIDDEN_PAD), lambda i: (0, 0, 0)),  # w2/w3
            pl.BlockSpec((3, HIDDEN_PAD), lambda i: (0, 0)),         # biases
        ],
        out_specs=pl.BlockSpec((TB, NUM_CLASSES), lambda i: (i, 0)),
        compiler_params=pltpu.CompilerParams(
            dimension_semantics=("parallel",)),                      # megacore sharding
        cost_estimate=pl.CostEstimate(
            flops=flops, transcendentals=2 * B_pad, bytes_accessed=bytes_accessed),
    )(x_b, w1, w23, b)
    return out[:B]


def init_params(input_dim, key):
    """Deterministic init mimicking PyTorch Linear default (uniform +/- 1/sqrt(fan_in)).
    Weights are stored transposed: [in_features, out_features]."""
    dims = [(input_dim, 50), (50, 50), (50, NUM_CLASSES)]
    params = {}
    for i, (fan_in, fan_out) in enumerate(dims, start=1):
        key, kw, kb = jax.random.split(key, 3)
        bound = 1.0 / jnp.sqrt(jnp.float32(fan_in))
        params[f"w{i}"] = jax.random.uniform(
            kw, (fan_in, fan_out), jnp.float32, minval=-bound, maxval=bound)
        params[f"b{i}"] = jax.random.uniform(
            kb, (1, fan_out), jnp.float32, minval=-bound, maxval=bound)
    return params


def sonar_mlp_ref(x, params):
    """Pure-JAX reference emulating the kernel numerics (bf16 operands, f32 accumulate)."""
    def mm(a, w):
        return jnp.dot(a.astype(jnp.bfloat16), w.astype(jnp.bfloat16),
                       preferred_element_type=jnp.float32)
    h = jnp.maximum(mm(x, params["w1"]) + params["b1"], 0.0)
    h = jnp.maximum(mm(h, params["w2"]) + params["b2"], 0.0)
    return jax.nn.softmax(mm(h, params["w3"]) + params["b3"], axis=1)


def sonar_mlp_ref_f32(x, params):
    """Pure-f32 reference (matches the PyTorch module exactly, modulo fp rounding)."""
    h = jnp.maximum(x @ params["w1"] + params["b1"], 0.0)
    h = jnp.maximum(h @ params["w2"] + params["b2"], 0.0)
    return jax.nn.softmax(h @ params["w3"] + params["b3"], axis=1)


if __name__ == "__main__":
    INPUT_DIM = 60  # Sonar dataset feature count
    BATCH = 8

    key = jax.random.PRNGKey(0)
    key, kx = jax.random.split(key)
    x = jax.random.normal(kx, (BATCH, INPUT_DIM), dtype=jnp.float32)
    params = init_params(INPUT_DIM, key)
    packed = pack_params(params)   # one-time packing (not in the per-call hot path)

    out = jax.block_until_ready(sonar_mlp(x, packed))

    # sanity: shape, exact-divide softmax rows sum to 1, matches references
    assert out.shape == (BATCH, NUM_CLASSES)
    assert jnp.allclose(jnp.sum(out, axis=1), 1.0, atol=1e-4)
    ref_bf16 = sonar_mlp_ref(x, params)
    assert jnp.allclose(out, ref_bf16, atol=2e-3), float(jnp.max(jnp.abs(out - ref_bf16)))
    ref_f32 = sonar_mlp_ref_f32(x, params)
    assert jnp.allclose(out, ref_f32, atol=5e-2), float(jnp.max(jnp.abs(out - ref_f32)))

    print("KERNEL_OK")
</pallas_src>

<mosaic_0001>
module attributes {stable_mosaic.version = 11 : i64} {
  func.func @mlp_kernel(%arg0: i32, %arg1: memref<8x60xbf16, #tpu.memory_space<vmem>>, %arg2: memref<60x128xbf16, #tpu.memory_space<vmem>>, %arg3: memref<2x128x128xbf16, #tpu.memory_space<vmem>>, %arg4: memref<3x128xf32, #tpu.memory_space<vmem>>, %arg5: memref<8x2xf32, #tpu.memory_space<vmem>>) attributes {dimension_semantics = [#tpu.dimension_semantics<parallel>], iteration_bounds = array<i64: 1>, scalar_prefetch = 0 : i64, scratch_operands = 0 : i64, tpu.core_type = #tpu.core_type<tc>, window_params = [{transform_indices = @transform_0, window_bounds = array<i64: 8, 60>}, {pipeline_mode = #tpu.pipeline_mode<synchronous>, transform_indices = @transform_1, window_bounds = array<i64: 60, 128>}, {pipeline_mode = #tpu.pipeline_mode<synchronous>, transform_indices = @transform_2, window_bounds = array<i64: 2, 128, 128>}, {pipeline_mode = #tpu.pipeline_mode<synchronous>, transform_indices = @transform_3, window_bounds = array<i64: 3, 128>}, {transform_indices = @transform_4, window_bounds = array<i64: 8, 2>}]} {
    %c0 = arith.constant 0 : index
    %c0_0 = arith.constant 0 : index
    %0 = vector.load %arg1[%c0, %c0_0] : memref<8x60xbf16, #tpu.memory_space<vmem>>, vector<8x60xbf16>
    %c0_1 = arith.constant 0 : index
    %c0_2 = arith.constant 0 : index
    %1 = vector.load %arg4[%c0_1, %c0_2] : memref<3x128xf32, #tpu.memory_space<vmem>>, vector<3x128xf32>
    %c0_3 = arith.constant 0 : index
    %c0_4 = arith.constant 0 : index
    %2 = vector.load %arg2[%c0_3, %c0_4] : memref<60x128xbf16, #tpu.memory_space<vmem>>, vector<60x128xbf16>
    %cst = arith.constant dense<0.000000e+00> : vector<8x128xf32>
    %3 = tpu.matmul %0, %2, %cst {dimension_numbers = #tpu.dot_dimension_numbers<[1], [0], [0], [1], [0, 0, 1, 1], [], []>} : vector<8x60xbf16>, vector<60x128xbf16>, vector<8x128xf32> -> vector<8x128xf32>
    %4 = vector.extract_strided_slice %1 {offsets = [0, 0], sizes = [1, 128], strides = [1, 1]} : vector<3x128xf32> to vector<1x128xf32>
    %5 = vector.broadcast %4 : vector<1x128xf32> to vector<8x128xf32>
    %6 = arith.addf %3, %5 : vector<8x128xf32>
    %cst_5 = arith.constant 0.000000e+00 : f32
    %7 = vector.broadcast %cst_5 : f32 to vector<8x128xf32>
    %8 = arith.maximumf %6, %7 : vector<8x128xf32>
    %9 = arith.truncf %8 : vector<8x128xf32> to vector<8x128xbf16>
    %c0_6 = arith.constant 0 : index
    %c0_7 = arith.constant 0 : index
    %c0_8 = arith.constant 0 : index
    %10 = vector.load %arg3[%c0_6, %c0_7, %c0_8] : memref<2x128x128xbf16, #tpu.memory_space<vmem>>, vector<1x128x128xbf16>
    %11 = vector.shape_cast %10 : vector<1x128x128xbf16> to vector<128x128xbf16>
    %cst_9 = arith.constant dense<0.000000e+00> : vector<8x128xf32>
    %12 = tpu.matmul %9, %11, %cst_9 {dimension_numbers = #tpu.dot_dimension_numbers<[1], [0], [0], [1], [0, 0, 1, 1], [], []>} : vector<8x128xbf16>, vector<128x128xbf16>, vector<8x128xf32> -> vector<8x128xf32>
    %13 = vector.extract_strided_slice %1 {offsets = [1, 0], sizes = [1, 128], strides = [1, 1]} : vector<3x128xf32> to vector<1x128xf32>
    %14 = vector.broadcast %13 : vector<1x128xf32> to vector<8x128xf32>
    %15 = arith.addf %12, %14 : vector<8x128xf32>
    %cst_10 = arith.constant 0.000000e+00 : f32
    %16 = vector.broadcast %cst_10 : f32 to vector<8x128xf32>
    %17 = arith.maximumf %15, %16 : vector<8x128xf32>
    %18 = arith.truncf %17 : vector<8x128xf32> to vector<8x128xbf16>
    %c1 = arith.constant 1 : index
    %c0_11 = arith.constant 0 : index
    %c0_12 = arith.constant 0 : index
    %19 = vector.load %arg3[%c1, %c0_11, %c0_12] : memref<2x128x128xbf16, #tpu.memory_space<vmem>>, vector<1x128x128xbf16>
    %20 = vector.shape_cast %19 : vector<1x128x128xbf16> to vector<128x128xbf16>
    %cst_13 = arith.constant dense<0.000000e+00> : vector<8x128xf32>
    %21 = tpu.matmul %18, %20, %cst_13 {dimension_numbers = #tpu.dot_dimension_numbers<[1], [0], [0], [1], [0, 0, 1, 1], [], []>} : vector<8x128xbf16>, vector<128x128xbf16>, vector<8x128xf32> -> vector<8x128xf32>
    %22 = vector.extract_strided_slice %1 {offsets = [2, 0], sizes = [1, 128], strides = [1, 1]} : vector<3x128xf32> to vector<1x128xf32>
    %23 = vector.broadcast %22 : vector<1x128xf32> to vector<8x128xf32>
    %24 = arith.addf %21, %23 : vector<8x128xf32>
    %25 = vector.extract_strided_slice %24 {offsets = [0, 0], sizes = [8, 1], strides = [1, 1]} : vector<8x128xf32> to vector<8x1xf32>
    %26 = vector.extract_strided_slice %24 {offsets = [0, 1], sizes = [8, 1], strides = [1, 1]} : vector<8x128xf32> to vector<8x1xf32>
    %27 = arith.maximumf %25, %26 : vector<8x1xf32>
    %28 = arith.subf %25, %27 : vector<8x1xf32>
    %29 = math.exp %28 : vector<8x1xf32>
    %30 = arith.subf %26, %27 : vector<8x1xf32>
    %31 = math.exp %30 : vector<8x1xf32>
    %32 = arith.addf %29, %31 : vector<8x1xf32>
    %cst_14 = arith.constant 1.000000e+00 : f32
    %33 = vector.broadcast %cst_14 : f32 to vector<8x1xf32>
    %34 = arith.divf %33, %32 : vector<8x1xf32>
    %35 = tpu.iota {dimensions = array<i32: 1>} : vector<8x2xi32>
    %c0_i32 = arith.constant 0 : i32
    %36 = vector.broadcast %c0_i32 : i32 to vector<8x2xi32>
    %37 = arith.cmpi eq, %35, %36 : vector<8x2xi32>
    %38 = arith.mulf %29, %34 : vector<8x1xf32>
    %39 = arith.mulf %31, %34 : vector<8x1xf32>
    %40 = vector.shape_cast %38 : vector<8x1xf32> to vector<8x1xf32>
    %41 = vector.broadcast %40 : vector<8x1xf32> to vector<8x2xf32>
    %42 = vector.shape_cast %39 : vector<8x1xf32> to vector<8x1xf32>
    %43 = vector.broadcast %42 : vector<8x1xf32> to vector<8x2xf32>
    %44 = arith.select %37, %41, %43 : vector<8x2xi1>, vector<8x2xf32>
    %c0_15 = arith.constant 0 : index
    %c0_16 = arith.constant 0 : index
    %45 = vector.load %arg5[%c0_15, %c0_16] : memref<8x2xf32, #tpu.memory_space<vmem>>, vector<8x2xf32>
    tpu.vector_store %arg5[%c0_15, %c0_16], %44 {strides = array<i32>} : memref<8x2xf32, #tpu.memory_space<vmem>>, vector<8x2xf32>,
    return
  }
  func.func @transform_0(%arg0: i32) -> (i32, i32) {
    %c0_i32 = arith.constant 0 : i32
    %c0_i32_0 = arith.constant 0 : i32
    return %arg0, %c0_i32 : i32, i32
  }
  func.func @transform_1(%arg0: i32) -> (i32, i32) {
    %c0_i32 = arith.constant 0 : i32
    %c0_i32_0 = arith.constant 0 : i32
    %c0_i32_1 = arith.constant 0 : i32
    return %c0_i32, %c0_i32_0 : i32, i32
  }
  func.func @transform_2(%arg0: i32) -> (i32, i32, i32) {
    %c0_i32 = arith.constant 0 : i32
    %c0_i32_0 = arith.constant 0 : i32
    %c0_i32_1 = arith.constant 0 : i32
    %c0_i32_2 = arith.constant 0 : i32
    return %c0_i32, %c0_i32_0, %c0_i32_1 : i32, i32, i32
  }
  func.func @transform_3(%arg0: i32) -> (i32, i32) {
    %c0_i32 = arith.constant 0 : i32
    %c0_i32_0 = arith.constant 0 : i32
    %c0_i32_1 = arith.constant 0 : i32
    return %c0_i32, %c0_i32_0 : i32, i32
  }
  func.func @transform_4(%arg0: i32) -> (i32, i32) {
    %c0_i32 = arith.constant 0 : i32
    %c0_i32_0 = arith.constant 0 : i32
    return %arg0, %c0_i32 : i32, i32
  }
}

</mosaic_0001>

<llo_original>
// kernel: tpu_custom_call.1
$region0: #{tpu_custom_call.1}
  #allocation0 [shape = 'u32[]', space=smem, size = 0x4, offset = 0x4, fixed_abs, tag = 'smem constant byte address 0x4 - core index']
  #allocation1 [shape = 'u32[144,128]{1,0:T(1,128)}', space=vmem, size = 0x12000, scoped, tag = 'internal scratch']
  %s0 = inlined_call_operand.hbm [shape: bf16[8,60], index: 0, kind: input, shape index: {}]
  %s1 = inlined_call_operand.hbm [shape: bf16[60,128], index: 1, kind: input, shape index: {}]
  %s2 = inlined_call_operand.hbm [shape: bf16[2,128,128], index: 2, kind: input, shape index: {}]
  %s3 = inlined_call_operand.vmem [shape: f32[3,128], index: 3, kind: input, shape index: {}]
  %s4 = inlined_call_operand.vmem [shape: f32[8,2], index: 4, kind: output, shape index: {}]
  %s5 = sld [smem:[#allocation0]]
  $region38: #{tpu_custom_call.1} parent=0
    _
  %s7 = ssub.s32 1, %s5
  %s8 = scalar_select 0, %s7, %s5
  $region1: #{tpu_custom_call.1} parent=0
    #allocation2 [shape = 'u8[2048]{0}', space=vmem, size = 0x800, scoped, tag = 'input window, operand 0, single buffered']
    #allocation3 [shape = 's32[1]{0}', space=sflag, size = 0x4, scoped, tag = 'scoped memory for tpu_custom_call.1']
    #allocation4 [shape = 'u8[16384]{0}', space=vmem, size = 0x4000, scoped, tag = 'input window, operand 1, single buffered']
    #allocation5 [shape = 's32[1]{0}', space=sflag, size = 0x4, scoped, tag = 'scoped memory for tpu_custom_call.1']
    #allocation6 [shape = 'u8[65536]{0}', space=vmem, size = 0x10000, scoped, tag = 'input window, operand 2, single buffered']
    %9 = vsyncpa [#allocation3], 0
    %10 = vsyncpa [#allocation5], 0
    // Predicated region
    $region2: #{tpu_custom_call.1} parent=1 // pred_check
      _
    $region3: #{tpu_custom_call.1} parent=1 // pred_check_branch
      %12 = sbr.rel (0) target = $region5
    $region4: #{tpu_custom_call.1} parent=1 // pred_region
      %s14 = ssub.s32 64, 64
      %15 = vsyncadd [#allocation3], %s14
      %s17 = sshll.u32 [#allocation2], 4
      %s18 = int_to_ptr.vmem [resolvable:$true] %s17
      %20 = dma.hbm_to_vmem [thread:$0]  %s0, 64, %s18, [#allocation3]
    $region5: #{tpu_custom_call.1} parent=1 // pred_fallthru
      _
    // Predicated region
    $region6: #{tpu_custom_call.1} parent=1 // pred_check
      _
    $region7: #{tpu_custom_call.1} parent=1 // pred_check_branch
      %22 = sbr.rel (0) target = $region9
    $region8: #{tpu_custom_call.1} parent=1 // pred_region
      %s24 = ssub.s32 512, 512
      %25 = vsyncadd [#allocation5], %s24
      %s26 = sshll.u32 [#allocation4], 4
      %s27 = int_to_ptr.vmem [resolvable:$true] %s26
      %32 = dma.hbm_to_vmem [thread:$0]  %s1, 512, %s27, [#allocation5], 64, 64, 4
    $region9: #{tpu_custom_call.1} parent=1 // pred_fallthru
      _
    // Predicated region
    $region10: #{tpu_custom_call.1} parent=1 // pred_check
      _
    $region11: #{tpu_custom_call.1} parent=1 // pred_check_branch
      %34 = sbr.rel (0) target = $region13
    $region12: #{tpu_custom_call.1} parent=1 // pred_region
      %s36 = ssub.s32 2048, 2048
      %37 = vsyncadd [#allocation5], %s36
      %s38 = sshll.u32 [#allocation6], 4
      %s39 = int_to_ptr.vmem [resolvable:$true] %s38
      %44 = dma.hbm_to_vmem [thread:$0]  %s2, 2048, %s39, [#allocation5], 64, 64, 4
    $region13: #{tpu_custom_call.1} parent=1 // pred_fallthru
      _
    // Predicated region
    $region14: #{tpu_custom_call.1} parent=1 // pred_check
      _
    $region15: #{tpu_custom_call.1} parent=1 // pred_check_branch
      %46 = sbr.rel (0) target = $region17
    $region16: #{tpu_custom_call.1} parent=1 // pred_region
      _
    $region17: #{tpu_custom_call.1} parent=1 // pred_fallthru
      _
    // Predicated region
    $region18: #{tpu_custom_call.1} parent=1 // pred_check
      _
    $region19: #{tpu_custom_call.1} parent=1 // pred_check_branch
      %48 = sbr.rel (0) target = $region21
    $region20: #{tpu_custom_call.1} parent=1 // pred_region
      %49 = dma.done [#allocation3], 64
    $region21: #{tpu_custom_call.1} parent=1 // pred_fallthru
      _
    // Predicated region
    $region22: #{tpu_custom_call.1} parent=1 // pred_check
      _
    $region23: #{tpu_custom_call.1} parent=1 // pred_check_branch
      %51 = sbr.rel (0) target = $region25
    $region24: #{tpu_custom_call.1} parent=1 // pred_region
      %52 = dma.done [#allocation5], 512
    $region25: #{tpu_custom_call.1} parent=1 // pred_fallthru
      _
    // Predicated region
    $region26: #{tpu_custom_call.1} parent=1 // pred_check
      _
    $region27: #{tpu_custom_call.1} parent=1 // pred_check_branch
      %54 = sbr.rel (0) target = $region29
    $region28: #{tpu_custom_call.1} parent=1 // pred_region
      %55 = dma.done [#allocation5], 2048
    $region29: #{tpu_custom_call.1} parent=1 // pred_fallthru
      _
    %v57 = vld [vmem:[#allocation2] sm:$0xf]
    %v58 = vld [vmem:[%s3] sm:$0x7]
    %v59 = vld [vmem:[#allocation4] sm:$0xf]
    %v60 = vld [vmem:[#allocation4 + $0x4] sm:$0xf]
    %v61 = vld [vmem:[#allocation4 + $0x8] sm:$0xf]
    %v62 = vld [vmem:[#allocation4 + $0xc] sm:$0xf]
    %v63 = vld [vmem:[#allocation4 + $0x10] sm:$0xf]
    %v64 = vld [vmem:[#allocation4 + $0x14] sm:$0xf]
    %v65 = vld [vmem:[#allocation4 + $0x18] sm:$0xf]
    %v66 = vld [vmem:[#allocation4 + $0x1c] sm:$0x3]
    %v67 = vlaneseq
    %v68 = vshrl.u32 %v67, 7
    %v69 = vsub.s32 0, %v68
    %v70 = vrot.slane %v58, %v69
    %v79 = vunpack.c.l.b16 %v59
    %v80 = vunpack.c.l.b16 %v60
    %v81 = vunpack.c.l.b16 %v61
    %v82 = vunpack.c.l.b16 %v62
    %v83 = vunpack.c.l.b16 %v63
    %v84 = vunpack.c.l.b16 %v64
    %v85 = vunpack.c.l.b16 %v65
    %v86 = vunpack.c.l.b16 %v66
    %v87 = vpack.c.b16 %v80, %v79
    %v88 = vpack.c.b16 %v82, %v81
    %v89 = vpack.c.b16 %v84, %v83
    %v90 = vpack.c.b16 %v86, %v85
    %vm94 = vcmask 490496
    %v96 = vsel %vm94, %v57, 0
    %vm98 = vcmask 1045504
    %v100 = vsel %vm98, %v90, 0
    %102 = vmatprep.subr.bf16.mxu0 0
    %103 = vmatpush1.bf16.msra.mxu0 0
    %104 = vmatprep.subr.bf16.mxu0 0
    %105 = vmatpush1.bf16.msra.mxu0 0
    %106 = vmatprep.subr.bf16.mxu0 0
    %107 = vmatpush1.bf16.msra.mxu0 0
    %108 = vmatprep.subr.bf16.mxu0 0
    %109 = vmatpush1.bf16.msra.mxu0 0
    %110 = vmatprep.subr.bf16.mxu0 0
    %111 = vmatpush1.bf16.msra.mxu0 %v100
    %112 = vmatprep.subr.bf16.mxu0 0
    %113 = vmatpush1.bf16.msra.mxu0 %v89
    %114 = vmatprep.subr.bf16.mxu0 0
    %115 = vmatpush1.bf16.msra.mxu0 %v88
    %116 = vmatprep.subr.bf16.mxu0 0
    %117 = vmatpush1.bf16.msra.mxu0 %v87
    %118 = vmatprep.subr.bf16.mxu0 0
    %119 = vmatpush2.bf16.msra.mxu0 0
    %120 = vmatprep.subr.bf16.mxu0 0
    %121 = vmatpush2.bf16.msra.mxu0 0
    %122 = vmatprep.subr.bf16.mxu0 0
    %123 = vmatpush2.bf16.msra.mxu0 0
    %124 = vmatprep.subr.bf16.mxu0 0
    %125 = vmatpush2.bf16.msra.mxu0 0
    %126 = vmatprep.subr.bf16.mxu0 0
    %127 = vmatpush2.bf16.msra.mxu0 0
    %128 = vmatprep.subr.bf16.mxu0 0
    %129 = vmatpush2.bf16.msra.mxu0 0
    %130 = vmatprep.subr.bf16.mxu0 0
    %131 = vmatpush2.bf16.msra.mxu0 0
    %132 = vmatprep.subr.bf16.mxu0 0
    %133 = vmatpush2.bf16.msra.mxu0 0
    %134 = vmatprep.mubr.bf16.mxu0 0
    %135 = vmatmul.mubr.bf16.gmra.mxu0 %v96
    %v136 = vpop.f32.mrf.mxu0
    %v137 = vadd.f32 %v70, %v136
    %v138 = vpop.f32.mrf.mxu0
    %v139 = vpop.f32.mrf.mxu0
    %v140 = vpop.f32.mrf.mxu0
    %141 = vdwg.mxu0
    %v142 = vmax.f32 %v137, 0.0
    %v143 = vpack.c.bf16 %v142, %v142
    %v144 = vld [vmem:[#allocation6] sm:$0xf]
    %v145 = vld [vmem:[#allocation6 + $0x4] sm:$0xf]
    %v146 = vld [vmem:[#allocation6 + $0x8] sm:$0xf]
    %v147 = vld [vmem:[#allocation6 + $0xc] sm:$0xf]
    %v148 = vld [vmem:[#allocation6 + $0x10] sm:$0xf]
    %v149 = vld [vmem:[#allocation6 + $0x14] sm:$0xf]
    %v150 = vld [vmem:[#allocation6 + $0x18] sm:$0xf]
    %v151 = vld [vmem:[#allocation6 + $0x1c] sm:$0xf]
    %v152 = vld [vmem:[#allocation6 + $0x20] sm:$0xf]
    %v153 = vld [vmem:[#allocation6 + $0x24] sm:$0xf]
    %v154 = vld [vmem:[#allocation6 + $0x28] sm:$0xf]
    %v155 = vld [vmem:[#allocation6 + $0x2c] sm:$0xf]
    %v156 = vld [vmem:[#allocation6 + $0x30] sm:$0xf]
    %v157 = vld [vmem:[#allocation6 + $0x34] sm:$0xf]
    %v158 = vld [vmem:[#allocation6 + $0x38] sm:$0xf]
    %v159 = vld [vmem:[#allocation6 + $0x3c] sm:$0xf]
    %v160 = vlaneseq
    %v161 = vshrl.u32 %v160, 7
    %v162 = vsub.s32 1, %v161
    %v163 = vrot.slane %v58, %v162
    %v180 = vunpack.c.l.b16 %v144
    %v181 = vunpack.c.l.b16 %v145
    %v182 = vunpack.c.l.b16 %v146
    %v183 = vunpack.c.l.b16 %v147
    %v184 = vunpack.c.l.b16 %v148
    %v185 = vunpack.c.l.b16 %v149
    %v186 = vunpack.c.l.b16 %v150
    %v187 = vunpack.c.l.b16 %v151
    %v188 = vunpack.c.l.b16 %v152
    %v189 = vunpack.c.l.b16 %v153
    %v190 = vunpack.c.l.b16 %v154
    %v191 = vunpack.c.l.b16 %v155
    %v192 = vunpack.c.l.b16 %v156
    %v193 = vunpack.c.l.b16 %v157
    %v194 = vunpack.c.l.b16 %v158
    %v195 = vunpack.c.l.b16 %v159
    %v196 = vpack.c.b16 %v181, %v180
    %v197 = vpack.c.b16 %v183, %v182
    %v198 = vpack.c.b16 %v185, %v184
    %v199 = vpack.c.b16 %v187, %v186
    %v200 = vpack.c.b16 %v189, %v188
    %v201 = vpack.c.b16 %v191, %v190
    %v202 = vpack.c.b16 %v193, %v192
    %v203 = vpack.c.b16 %v195, %v194
    %212 = vmatprep.subr.bf16.mxu0 0
    %213 = vmatpush1.bf16.msra.mxu0 %v203
    %214 = vmatprep.subr.bf16.mxu0 0
    %215 = vmatpush1.bf16.msra.mxu0 %v202
    %216 = vmatprep.subr.bf16.mxu0 0
    %217 = vmatpush1.bf16.msra.mxu0 %v201
    %218 = vmatprep.subr.bf16.mxu0 0
    %219 = vmatpush1.bf16.msra.mxu0 %v200
    %220 = vmatprep.subr.bf16.mxu0 0
    %221 = vmatpush1.bf16.msra.mxu0 %v199
    %222 = vmatprep.subr.bf16.mxu0 0
    %223 = vmatpush1.bf16.msra.mxu0 %v198
    %224 = vmatprep.subr.bf16.mxu0 0
    %225 = vmatpush1.bf16.msra.mxu0 %v197
    %226 = vmatprep.subr.bf16.mxu0 0
    %227 = vmatpush1.bf16.msra.mxu0 %v196
    %228 = vmatprep.subr.bf16.mxu0 0
    %229 = vmatpush2.bf16.msra.mxu0 0
    %230 = vmatprep.subr.bf16.mxu0 0
    %231 = vmatpush2.bf16.msra.mxu0 0
    %232 = vmatprep.subr.bf16.mxu0 0
    %233 = vmatpush2.bf16.msra.mxu0 0
    %234 = vmatprep.subr.bf16.mxu0 0
    %235 = vmatpush2.bf16.msra.mxu0 0
    %236 = vmatprep.subr.bf16.mxu0 0
    %237 = vmatpush2.bf16.msra.mxu0 0
    %238 = vmatprep.subr.bf16.mxu0 0
    %239 = vmatpush2.bf16.msra.mxu0 0
    %240 = vmatprep.subr.bf16.mxu0 0
    %241 = vmatpush2.bf16.msra.mxu0 0
    %242 = vmatprep.subr.bf16.mxu0 0
    %243 = vmatpush2.bf16.msra.mxu0 0
    %244 = vmatprep.mubr.bf16.mxu0 0
    %245 = vmatmul.mubr.bf16.gmra.mxu0 %v143
    %v246 = vpop.f32.mrf.mxu0
    %v247 = vadd.f32 %v163, %v246
    %v248 = vpop.f32.mrf.mxu0
    %v249 = vpop.f32.mrf.mxu0
    %v250 = vpop.f32.mrf.mxu0
    %251 = vdwg.mxu0
    %v252 = vmax.f32 %v247, 0.0
    %v253 = vpack.c.bf16 %v252, %v252
    %s254 = scalar_lea.vmem [#allocation6], 64
    %v255 = vld [vmem:[%s254] sm:$0xf]
    %v256 = vld [vmem:[%s254 + $0x4] sm:$0xf]
    %v257 = vld [vmem:[%s254 + $0x8] sm:$0xf]
    %v258 = vld [vmem:[%s254 + $0xc] sm:$0xf]
    %v259 = vld [vmem:[%s254 + $0x10] sm:$0xf]
    %v260 = vld [vmem:[%s254 + $0x14] sm:$0xf]
    %v261 = vld [vmem:[%s254 + $0x18] sm:$0xf]
    %v262 = vld [vmem:[%s254 + $0x1c] sm:$0xf]
    %v263 = vld [vmem:[%s254 + $0x20] sm:$0xf]
    %v264 = vld [vmem:[%s254 + $0x24] sm:$0xf]
    %v265 = vld [vmem:[%s254 + $0x28] sm:$0xf]
    %v266 = vld [vmem:[%s254 + $0x2c] sm:$0xf]
    %v267 = vld [vmem:[%s254 + $0x30] sm:$0xf]
    %v268 = vld [vmem:[%s254 + $0x34] sm:$0xf]
    %v269 = vld [vmem:[%s254 + $0x38] sm:$0xf]
    %v270 = vld [vmem:[%s254 + $0x3c] sm:$0xf]
    %v271 = vlaneseq
    %v272 = vshrl.u32 %v271, 7
    %v273 = vsub.s32 2, %v272
    %v274 = vrot.slane %v58, %v273
    %v291 = vunpack.c.l.b16 %v255
    %v292 = vunpack.c.l.b16 %v256
    %v293 = vunpack.c.l.b16 %v257
    %v294 = vunpack.c.l.b16 %v258
    %v295 = vunpack.c.l.b16 %v259
    %v296 = vunpack.c.l.b16 %v260
    %v297 = vunpack.c.l.b16 %v261
    %v298 = vunpack.c.l.b16 %v262
    %v299 = vunpack.c.l.b16 %v263
    %v300 = vunpack.c.l.b16 %v264
    %v301 = vunpack.c.l.b16 %v265
    %v302 = vunpack.c.l.b16 %v266
    %v303 = vunpack.c.l.b16 %v267
    %v304 = vunpack.c.l.b16 %v268
    %v305 = vunpack.c.l.b16 %v269
    %v306 = vunpack.c.l.b16 %v270
    %v307 = vpack.c.b16 %v292, %v291
    %v308 = vpack.c.b16 %v294, %v293
    %v309 = vpack.c.b16 %v296, %v295
    %v310 = vpack.c.b16 %v298, %v297
    %v311 = vpack.c.b16 %v300, %v299
    %v312 = vpack.c.b16 %v302, %v301
    %v313 = vpack.c.b16 %v304, %v303
    %v314 = vpack.c.b16 %v306, %v305
    %323 = vmatprep.subr.bf16.mxu0 0
    %324 = vmatpush1.bf16.msra.mxu0 %v314
    %325 = vmatprep.subr.bf16.mxu0 0
    %326 = vmatpush1.bf16.msra.mxu0 %v313
    %327 = vmatprep.subr.bf16.mxu0 0
    %328 = vmatpush1.bf16.msra.mxu0 %v312
    %329 = vmatprep.subr.bf16.mxu0 0
    %330 = vmatpush1.bf16.msra.mxu0 %v311
    %331 = vmatprep.subr.bf16.mxu0 0
    %332 = vmatpush1.bf16.msra.mxu0 %v310
    %333 = vmatprep.subr.bf16.mxu0 0
    %334 = vmatpush1.bf16.msra.mxu0 %v309
    %335 = vmatprep.subr.bf16.mxu0 0
    %336 = vmatpush1.bf16.msra.mxu0 %v308
    %337 = vmatprep.subr.bf16.mxu0 0
    %338 = vmatpush1.bf16.msra.mxu0 %v307
    %339 = vmatprep.subr.bf16.mxu0 0
    %340 = vmatpush2.bf16.msra.mxu0 0
    %341 = vmatprep.subr.bf16.mxu0 0
    %342 = vmatpush2.bf16.msra.mxu0 0
    %343 = vmatprep.subr.bf16.mxu0 0
    %344 = vmatpush2.bf16.msra.mxu0 0
    %345 = vmatprep.subr.bf16.mxu0 0
    %346 = vmatpush2.bf16.msra.mxu0 0
    %347 = vmatprep.subr.bf16.mxu0 0
    %348 = vmatpush2.bf16.msra.mxu0 0
    %349 = vmatprep.subr.bf16.mxu0 0
    %350 = vmatpush2.bf16.msra.mxu0 0
    %351 = vmatprep.subr.bf16.mxu0 0
    %352 = vmatpush2.bf16.msra.mxu0 0
    %353 = vmatprep.subr.bf16.mxu0 0
    %354 = vmatpush2.bf16.msra.mxu0 0
    %355 = vmatprep.mubr.bf16.mxu0 0
    %356 = vmatmul.mubr.bf16.gmra.mxu0 %v253
    %v357 = vpop.f32.mrf.mxu0
    %v358 = vadd.f32 %v274, %v357
    %v359 = vpop.f32.mrf.mxu0
    %v360 = vpop.f32.mrf.mxu0
    %v361 = vpop.f32.mrf.mxu0
    %362 = vdwg.mxu0
    %364 = vrot.lane.b32.xlu0 %v358, 127
    %v365 = vpop.permute.xlu0 %364
    %v367 = vmax.f32 %v358, %v365
    %v368 = vsub.f32 %v358, %v367
    %v369 = vmul.f32 %v368, 1.442695
    %v370 = vpow.pop %v369
    %372 = vrot.lane.b32.xlu0 %v367, 1
    %v373 = vpop.permute.xlu0 %372
    %v375 = vsub.f32 %v358, %v373
    %v376 = vmul.f32 %v375, 1.442695
    %v377 = vpow.pop %v376
    %379 = vrot.lane.b32.xlu0 %v377, 127
    %v380 = vpop.permute.xlu0 %379
    %v382 = vadd.f32 %v370, %v380
    %v383 = vrcp.pop %v382
    %v384 = vmul.f32 1.0, %v383
    %v385 = vlaneseq
    %v386 = vand.u32 %v385, 127
    %vm387 = vcmp.eq.s32.totalorder %v386, 0
    %v388 = vmul.f32 %v370, %v384
    %390 = vrot.lane.b32.xlu0 %v384, 1
    %v391 = vpop.permute.xlu0 %390
    %v393 = vmul.f32 %v377, %v391
    %395 = vset.pattern.permute.xlu0 0
    %396 = vperm.xlu0 %395, %v388
    %v397 = vpop.permute.xlu0 %396
    %400 = vset.pattern.permute.xlu0 1
    %401 = vperm.xlu0 %400, %v393
    %v402 = vpop.permute.xlu0 %401
    %v404 = vsel %vm387, %v397, %v402
    %vm405 = vcmask 15360
    %406 = vst.msk [vmem:[%s4] sm:$0xff] %vm405, %v404
    // Predicated region
    $region30: #{tpu_custom_call.1} parent=1 // pred_check
      _
    $region31: #{tpu_custom_call.1} parent=1 // pred_check_branch
      %408 = sbr.rel (0) target = $region33
    $region32: #{tpu_custom_call.1} parent=1 // pred_region
      _
    $region33: #{tpu_custom_call.1} parent=1 // pred_fallthru
      _
    // Predicated region
    $region34: #{tpu_custom_call.1} parent=1 // pred_check
      _
    $region35: #{tpu_custom_call.1} parent=1 // pred_check_branch
      %410 = sbr.rel (0) target = $region37
    $region36: #{tpu_custom_call.1} parent=1 // pred_region
      _
    $region37: #{tpu_custom_call.1} parent=1 // pred_fallthru
      _
    %411 = vsyncpa [#allocation3], 1
    %412 = vsyncpa [#allocation5], 1

</llo_original>
